<compile_context>
chip_gen: v5e
topology: v5e:2x2
jax: 0.10.0
libtpu: 0.0.40
codegen_flags: <defaults>
</compile_context>

<pallas_src>
import jax
import jax.numpy as jnp
from jax.experimental import pallas as pl
from jax.experimental.pallas import tpu as pltpu


def _round_up(x, m):
    return ((x + m - 1) // m) * m


def _vmem_capacity_bytes():
    try:
        info = pltpu.get_tpu_info()
        cap = getattr(info, "vmem_capacity_bytes", None)
        if cap:
            return int(cap)
    except Exception:
        pass
    return 64 << 20  # conservative default (v7x per-TC VMEM)


def _pool_fc_kernel(x_ref, mask_ref, w_ref, b_ref, out_ref, sumx_ref, summ_ref):
    # x_ref:    (b_tile, s_tile, E)  bf16/f32
    # mask_ref: (b_tile, 1, s_tile)  bf16
    # w_ref:    (O, E)               f32   (PyTorch nn.Linear layout)
    # b_ref:    (1, 1, O)            f32
    # out_ref:  (b_tile, 1, O)       f32
    # sumx_ref: (b_tile, 1, E) f32 scratch; summ_ref: (b_tile, 1, 1) f32 scratch
    s = pl.program_id(1)

    @pl.when(s == 0)
    def _():
        sumx_ref[...] = jnp.zeros_like(sumx_ref)
        summ_ref[...] = jnp.zeros_like(summ_ref)

    x = x_ref[...]                         # (b_tile, s_tile, E)   bf16
    m = mask_ref[...]                      # (b_tile, 1, s_tile)   bf16

    # Masked seq-sum on the MXU: per batch row a (1, s) @ (s, E) contraction,
    # bf16 in / f32 accumulate.  No f32 x-tile copy, VALU slot stays free.
    sumx_ref[...] += jax.lax.dot_general(
        m, x,
        dimension_numbers=(((2,), (1,)), ((0,), (0,))),
        preferred_element_type=jnp.float32)                       # (b_tile, 1, E)
    summ_ref[...] += jnp.sum(m.astype(jnp.float32), axis=2, keepdims=True)

    @pl.when(s == pl.num_programs(1) - 1)
    def _():
        sum_m = summ_ref[...]
        sum_m = jnp.where(sum_m == 0.0, jnp.ones_like(sum_m), sum_m)
        avg = sumx_ref[...] / sum_m                                # (b_tile, 1, E)
        w = w_ref[...]                                             # (O, E)
        if w_ref.shape[0] == 1:
            # O == 1: VPU multiply + lane reduce; MXU not needed.
            out = jnp.sum(avg * w, axis=-1, keepdims=True)         # (b_tile, 1, 1)
        else:
            out = jax.lax.dot_general(
                avg, w, (((2,), (1,)), ((), ())),
                preferred_element_type=jnp.float32)                # (b_tile, 1, O)
        out_ref[...] = (out + b_ref[...]).astype(out_ref.dtype)


def masked_pool_fc(x, mask, w_oe, bias, *, x_tile_target_bytes=None):
    """x: (B,S,E) bf16/f32, mask: (B,S), w_oe: (O,E), bias: (O,) -> (B,O) f32."""
    B, S, E = x.shape
    O = w_oe.shape[0]
    itemsize = jnp.dtype(x.dtype).itemsize

    vmem_cap = _vmem_capacity_bytes()
    if x_tile_target_bytes is None:
        # Pure HBM streaming: larger tiles amortize the ~0.35us per-step cost.
        x_tile_target_bytes = (16 << 20) if vmem_cap >= (128 << 20) else (12 << 20)

    # Lane dim (E) must be a multiple of 128 or VMEM/DMA is wasted.
    E_pad = _round_up(E, 128)

    # Batch tile: leading (unconstrained) dim.  Keep grid(0) >= 2 when B >= 2
    # so both v7x TensorCores get work.
    # TODO(synk): for B == 1 a seq-split across the two v7x cores (partial
    # sums + tiny combine) would be needed to use the second core.
    b_tile = max(1, min(8, -(-B // 2)))
    B_pad = _round_up(B, b_tile)

    # Seq tile: multiple of 128 (mask lanes / x sublanes stay aligned).
    s_tile = x_tile_target_bytes // max(1, b_tile * E_pad * itemsize)
    s_tile = max(128, (s_tile // 128) * 128)
    s_tile = min(s_tile, _round_up(S, 128))
    S_pad = _round_up(S, s_tile)

    # Pad; padded rows/positions carry mask == 0 so they don't affect the sums.
    if (B_pad, S_pad, E_pad) != (B, S, E):
        x = jnp.pad(x, ((0, B_pad - B), (0, S_pad - S), (0, E_pad - E)))
    if (B_pad, S_pad) != (B, S):
        mask = jnp.pad(mask, ((0, B_pad - B), (0, S_pad - S)))
    mask3 = mask.astype(jnp.bfloat16).reshape(B_pad, 1, S_pad)
    w = w_oe.astype(jnp.float32)
    if E_pad != E:
        w = jnp.pad(w, ((0, 0), (0, E_pad - E)))
    b3 = bias.astype(jnp.float32).reshape(1, 1, O)

    grid = (B_pad // b_tile, S_pad // s_tile)

    # VMEM budget: double-buffered x + mask tiles (with sublane padding of the
    # (.,1,s) mask block), f32 scratch, weights/out, 8 MiB slack; clamped under
    # the physical VMEM of this generation.
    bytes_x_tile = b_tile * s_tile * E_pad * itemsize
    bytes_m_tile = b_tile * 16 * s_tile * 2
    bytes_fixed = 4 * (b_tile * 8 * E_pad            # sumx scratch (sublane-padded)
                       + b_tile * 8 * 128            # summ scratch
                       + max(O, 8) * E_pad           # fc weight
                       + 8 * 128                     # bias
                       + 2 * b_tile * 8 * max(O, 128))   # double-buffered out tile
    vmem_needed = 2 * (bytes_x_tile + bytes_m_tile) + bytes_fixed + (8 << 20)
    vmem_limit = int(min(max(vmem_needed, 32 << 20), vmem_cap - (8 << 20)))

    out = pl.pallas_call(
        _pool_fc_kernel,
        out_shape=jax.ShapeDtypeStruct((B_pad, 1, O), jnp.float32),
        grid=grid,
        in_specs=[
            pl.BlockSpec((b_tile, s_tile, E_pad), lambda bi, si: (bi, si, 0)),
            pl.BlockSpec((b_tile, 1, s_tile), lambda bi, si: (bi, 0, si)),
            pl.BlockSpec((O, E_pad), lambda bi, si: (0, 0)),
            pl.BlockSpec((1, 1, O), lambda bi, si: (0, 0, 0)),
        ],
        out_specs=pl.BlockSpec((b_tile, 1, O), lambda bi, si: (bi, 0, 0)),
        scratch_shapes=[
            pltpu.VMEM((b_tile, 1, E_pad), jnp.float32),
            pltpu.VMEM((b_tile, 1, 1), jnp.float32),
        ],
        compiler_params=pltpu.CompilerParams(
            dimension_semantics=("parallel", "arbitrary"),
            vmem_limit_bytes=vmem_limit,
        ),
    )(x, mask3, w, b3)
    return out[:B, 0, :]


def pretrained_model_stub(tokens, embed_table):
    # TODO(synk): stands in for the ESM-style pretrained backbone
    # (repr_layers / return_contacts); only its output contract is kept.
    reps = embed_table[tokens]  # (B, S, E), kept in the backbone's bf16 dtype
    return {"representations": {33: reps}}


def model_forward(tokens, mask, params):
    # self_attention_layers=False path of Model.forward
    results = pretrained_model_stub(tokens, params["embed_table"])
    token_representations = results["representations"][33]  # bf16, streamed from HBM
    out = masked_pool_fc(
        token_representations,
        mask,
        params["fc_w"],   # (O, E)  PyTorch nn.Linear layout
        params["fc_b"],   # (O,)
    )
    # output.squeeze(-1): only squeezes when output_dim == 1 (torch semantics)
    if out.shape[-1] == 1:
        out = out[..., 0]
    return out, results


if __name__ == "__main__":
    B, S, E, O, VOCAB = 2, 8, 32, 1, 16

    key = jax.random.PRNGKey(0)
    k1, k2, k3, k4, k5 = jax.random.split(key, 5)

    tokens = jax.random.randint(k1, (B, S), 0, VOCAB, dtype=jnp.int32)
    mask = (jax.random.uniform(k2, (B, S)) > 0.3).astype(jnp.float32)

    params = {
        # backbone output kept in bf16 (halves the dominant HBM stream)
        "embed_table": (jax.random.normal(k3, (VOCAB, E), dtype=jnp.float32) * 0.1
                        ).astype(jnp.bfloat16),
        "fc_w": jax.random.normal(k4, (O, E), dtype=jnp.float32) * 0.1,
        "fc_b": jax.random.normal(k5, (O,), dtype=jnp.float32) * 0.1,
    }

    out, results = model_forward(tokens, mask, params)
    out = jax.block_until_ready(out)

    # pure-JAX reference (same bf16 reps, f32 math)
    reps = params["embed_table"][tokens].astype(jnp.float32)
    m3 = mask[:, :, None]
    sum_x = jnp.sum(reps * m3, axis=1)
    sum_m = jnp.sum(m3, axis=1)
    sum_m = jnp.where(sum_m == 0, jnp.ones_like(sum_m), sum_m)
    ref = (sum_x / sum_m) @ params["fc_w"].T + params["fc_b"]
    ref = jnp.squeeze(ref, axis=-1)
    assert jnp.allclose(out, ref, atol=1e-3, rtol=1e-3), (out, ref)

    print("KERNEL_OK")
</pallas_src>

<mosaic_0001>
module attributes {stable_mosaic.version = 11 : i64} {
  func.func @_pool_fc_kernel(%arg0: i32, %arg1: i32, %arg2: memref<1x128x128xbf16, #tpu.memory_space<vmem>>, %arg3: memref<1x1x128xbf16, #tpu.memory_space<vmem>>, %arg4: memref<1x128xf32, #tpu.memory_space<vmem>>, %arg5: memref<1x1x1xf32, #tpu.memory_space<vmem>>, %arg6: memref<1x1x1xf32, #tpu.memory_space<vmem>>, %arg7: memref<1x1x128xf32, #tpu.memory_space<vmem>>, %arg8: memref<1x1x1xf32, #tpu.memory_space<vmem>>) attributes {dimension_semantics = [#tpu.dimension_semantics<parallel>, #tpu.dimension_semantics<arbitrary>], iteration_bounds = array<i64: 2, 1>, scalar_prefetch = 0 : i64, scratch_operands = 2 : i64, tpu.core_type = #tpu.core_type<tc>, window_params = [{transform_indices = @transform_0, window_bounds = array<i64: 1, 128, 128>}, {transform_indices = @transform_1, window_bounds = array<i64: 1, 1, 128>}, {pipeline_mode = #tpu.pipeline_mode<synchronous>, transform_indices = @transform_2, window_bounds = array<i64: 1, 128>}, {pipeline_mode = #tpu.pipeline_mode<synchronous>, transform_indices = @transform_3, window_bounds = array<i64: 1, 1, 1>}, {transform_indices = @transform_4, window_bounds = array<i64: 1, 1, 1>}]} {
    %c0_i32 = arith.constant 0 : i32
    %0 = arith.cmpi eq, %arg1, %c0_i32 : i32
    %1 = arith.extui %0 : i1 to i32
    %c0_i32_0 = arith.constant 0 : i32
    %2 = arith.cmpi ne, %1, %c0_i32_0 : i32
    scf.if %2 {
      %cst_21 = arith.constant 0.000000e+00 : f32
      %18 = vector.broadcast %cst_21 : f32 to vector<1x1x128xf32>
      %c0_22 = arith.constant 0 : index
      %c0_23 = arith.constant 0 : index
      %c0_24 = arith.constant 0 : index
      %19 = vector.load %arg7[%c0_22, %c0_23, %c0_24] : memref<1x1x128xf32, #tpu.memory_space<vmem>>, vector<1x1x128xf32>
      tpu.vector_store %arg7[%c0_22, %c0_23, %c0_24], %18 {strides = array<i32>} : memref<1x1x128xf32, #tpu.memory_space<vmem>>, vector<1x1x128xf32>,
      %cst_25 = arith.constant 0.000000e+00 : f32
      %20 = vector.broadcast %cst_25 : f32 to vector<1x1x1xf32>
      %c0_26 = arith.constant 0 : index
      %c0_27 = arith.constant 0 : index
      %c0_28 = arith.constant 0 : index
      %21 = vector.load %arg8[%c0_26, %c0_27, %c0_28] : memref<1x1x1xf32, #tpu.memory_space<vmem>>, vector<1x1x1xf32>
      tpu.vector_store %arg8[%c0_26, %c0_27, %c0_28], %20 {strides = array<i32>} : memref<1x1x1xf32, #tpu.memory_space<vmem>>, vector<1x1x1xf32>,
    } else {
    }
    %c0 = arith.constant 0 : index
    %c0_1 = arith.constant 0 : index
    %c0_2 = arith.constant 0 : index
    %3 = vector.load %arg2[%c0, %c0_1, %c0_2] : memref<1x128x128xbf16, #tpu.memory_space<vmem>>, vector<1x128x128xbf16>
    %c0_3 = arith.constant 0 : index
    %c0_4 = arith.constant 0 : index
    %c0_5 = arith.constant 0 : index
    %4 = vector.load %arg3[%c0_3, %c0_4, %c0_5] : memref<1x1x128xbf16, #tpu.memory_space<vmem>>, vector<1x1x128xbf16>
    %c0_6 = arith.constant 0 : index
    %c0_7 = arith.constant 0 : index
    %c0_8 = arith.constant 0 : index
    %5 = vector.load %arg7[%c0_6, %c0_7, %c0_8] : memref<1x1x128xf32, #tpu.memory_space<vmem>>, vector<1x1x128xf32>
    %cst = arith.constant dense<0.000000e+00> : vector<1x1x128xf32>
    %6 = tpu.matmul %4, %3, %cst {dimension_numbers = #tpu.dot_dimension_numbers<[2], [1], [1], [2], [0, 0, 0, 1, 1, 2], [0], [0]>} : vector<1x1x128xbf16>, vector<1x128x128xbf16>, vector<1x1x128xf32> -> vector<1x1x128xf32>
    %7 = arith.addf %5, %6 : vector<1x1x128xf32>
    %c0_9 = arith.constant 0 : index
    %c0_10 = arith.constant 0 : index
    %c0_11 = arith.constant 0 : index
    %8 = vector.load %arg7[%c0_9, %c0_10, %c0_11] : memref<1x1x128xf32, #tpu.memory_space<vmem>>, vector<1x1x128xf32>
    tpu.vector_store %arg7[%c0_9, %c0_10, %c0_11], %7 {strides = array<i32>} : memref<1x1x128xf32, #tpu.memory_space<vmem>>, vector<1x1x128xf32>,
    %c0_12 = arith.constant 0 : index
    %c0_13 = arith.constant 0 : index
    %c0_14 = arith.constant 0 : index
    %9 = vector.load %arg8[%c0_12, %c0_13, %c0_14] : memref<1x1x1xf32, #tpu.memory_space<vmem>>, vector<1x1x1xf32>
    %10 = arith.extf %4 : vector<1x1x128xbf16> to vector<1x1x128xf32>
    %cst_15 = arith.constant dense<0.000000e+00> : vector<1x1xf32>
    %11 = vector.multi_reduction <add>, %10, %cst_15 [2] : vector<1x1x128xf32> to vector<1x1xf32>
    %12 = vector.shape_cast %11 : vector<1x1xf32> to vector<1x1x1xf32>
    %13 = arith.addf %9, %12 : vector<1x1x1xf32>
    %c0_16 = arith.constant 0 : index
    %c0_17 = arith.constant 0 : index
    %c0_18 = arith.constant 0 : index
    %14 = vector.load %arg8[%c0_16, %c0_17, %c0_18] : memref<1x1x1xf32, #tpu.memory_space<vmem>>, vector<1x1x1xf32>
    tpu.vector_store %arg8[%c0_16, %c0_17, %c0_18], %13 {strides = array<i32>} : memref<1x1x1xf32, #tpu.memory_space<vmem>>, vector<1x1x1xf32>,
    %c0_i32_19 = arith.constant 0 : i32
    %15 = arith.cmpi eq, %arg1, %c0_i32_19 : i32
    %16 = arith.extui %15 : i1 to i32
    %c0_i32_20 = arith.constant 0 : i32
    %17 = arith.cmpi ne, %16, %c0_i32_20 : i32
    scf.if %17 {
      %c0_21 = arith.constant 0 : index
      %c0_22 = arith.constant 0 : index
      %c0_23 = arith.constant 0 : index
      %18 = vector.load %arg8[%c0_21, %c0_22, %c0_23] : memref<1x1x1xf32, #tpu.memory_space<vmem>>, vector<1x1x1xf32>
      %cst_24 = arith.constant 0.000000e+00 : f32
      %19 = vector.broadcast %cst_24 : f32 to vector<1x1x1xf32>
      %20 = arith.cmpf oeq, %18, %19 : vector<1x1x1xf32>
      %cst_25 = arith.constant 1.000000e+00 : f32
      %21 = vector.broadcast %cst_25 : f32 to vector<1x1x1xf32>
      %22 = arith.select %20, %21, %18 : vector<1x1x1xi1>, vector<1x1x1xf32>
      %c0_26 = arith.constant 0 : index
      %c0_27 = arith.constant 0 : index
      %c0_28 = arith.constant 0 : index
      %23 = vector.load %arg7[%c0_26, %c0_27, %c0_28] : memref<1x1x128xf32, #tpu.memory_space<vmem>>, vector<1x1x128xf32>
      %24 = vector.broadcast %22 : vector<1x1x1xf32> to vector<1x1x128xf32>
      %25 = arith.divf %23, %24 : vector<1x1x128xf32>
      %c0_29 = arith.constant 0 : index
      %c0_30 = arith.constant 0 : index
      %26 = vector.load %arg4[%c0_29, %c0_30] : memref<1x128xf32, #tpu.memory_space<vmem>>, vector<1x128xf32>
      %27 = vector.shape_cast %26 : vector<1x128xf32> to vector<1x1x128xf32>
      %28 = arith.mulf %25, %27 : vector<1x1x128xf32>
      %cst_31 = arith.constant dense<0.000000e+00> : vector<1x1xf32>
      %29 = vector.multi_reduction <add>, %28, %cst_31 [2] : vector<1x1x128xf32> to vector<1x1xf32>
      %30 = vector.shape_cast %29 : vector<1x1xf32> to vector<1x1x1xf32>
      %c0_32 = arith.constant 0 : index
      %c0_33 = arith.constant 0 : index
      %c0_34 = arith.constant 0 : index
      %31 = vector.load %arg5[%c0_32, %c0_33, %c0_34] : memref<1x1x1xf32, #tpu.memory_space<vmem>>, vector<1x1x1xf32>
      %32 = arith.addf %30, %31 : vector<1x1x1xf32>
      %c0_35 = arith.constant 0 : index
      %c0_36 = arith.constant 0 : index
      %c0_37 = arith.constant 0 : index
      %33 = vector.load %arg6[%c0_35, %c0_36, %c0_37] : memref<1x1x1xf32, #tpu.memory_space<vmem>>, vector<1x1x1xf32>
      tpu.vector_store %arg6[%c0_35, %c0_36, %c0_37], %32 {strides = array<i32>} : memref<1x1x1xf32, #tpu.memory_space<vmem>>, vector<1x1x1xf32>,
    } else {
    }
    return
  }
  func.func @transform_0(%arg0: i32, %arg1: i32) -> (i32, i32, i32) {
    %c0_i32 = arith.constant 0 : i32
    %c0_i32_0 = arith.constant 0 : i32
    return %arg0, %arg1, %c0_i32 : i32, i32, i32
  }
  func.func @transform_1(%arg0: i32, %arg1: i32) -> (i32, i32, i32) {
    %c0_i32 = arith.constant 0 : i32
    %c0_i32_0 = arith.constant 0 : i32
    return %arg0, %c0_i32, %arg1 : i32, i32, i32
  }
  func.func @transform_2(%arg0: i32, %arg1: i32) -> (i32, i32) {
    %c0_i32 = arith.constant 0 : i32
    %c0_i32_0 = arith.constant 0 : i32
    %c0_i32_1 = arith.constant 0 : i32
    return %c0_i32, %c0_i32_0 : i32, i32
  }
  func.func @transform_3(%arg0: i32, %arg1: i32) -> (i32, i32, i32) {
    %c0_i32 = arith.constant 0 : i32
    %c0_i32_0 = arith.constant 0 : i32
    %c0_i32_1 = arith.constant 0 : i32
    %c0_i32_2 = arith.constant 0 : i32
    return %c0_i32, %c0_i32_0, %c0_i32_1 : i32, i32, i32
  }
  func.func @transform_4(%arg0: i32, %arg1: i32) -> (i32, i32, i32) {
    %c0_i32 = arith.constant 0 : i32
    %c0_i32_0 = arith.constant 0 : i32
    %c0_i32_1 = arith.constant 0 : i32
    return %arg0, %c0_i32, %c0_i32_0 : i32, i32, i32
  }
}

</mosaic_0001>

<llo_original>
// kernel: tpu_custom_call.1
$region0: #{tpu_custom_call.1}
  #allocation0 [shape = 'u32[]', space=smem, size = 0x4, offset = 0x4, fixed_abs, tag = 'smem constant byte address 0x4 - core index']
  #allocation1 [shape = 'u32[72,128]{1,0:T(1,128)}', space=vmem, size = 0x9000, scoped, tag = 'internal scratch']
  #allocation2 [shape = 'f32[1,1,128]{2,1,0:T(1,128)}', space=vmem, size = 0x200, scoped, tag = 'scratch operand']
  #allocation3 [shape = 'f32[1,1,1]{2,1,0:T(1,128)}', space=vmem, size = 0x200, scoped, tag = 'scratch operand']
  #allocation4 [shape = 'f32[1,1,1]{2,1,0:T(1,128)S(1)}', space=vmem, size = 0x200, scoped, tag = 'scoped memory for tpu_custom_call.1']
  %s0 = inlined_call_operand.hbm [shape: bf16[2,128,128], index: 0, kind: input, shape index: {}]
  %s1 = inlined_call_operand.vmem [shape: bf16[2,1,128], index: 1, kind: input, shape index: {}]
  %s2 = inlined_call_operand.vmem [shape: f32[1,128], index: 2, kind: input, shape index: {}]
  %s3 = inlined_call_operand.<no memory space> [shape: f32[1,1,1], index: 3, kind: input, shape index: {}]
  %s4 = inlined_call_operand.vmem [shape: f32[2,1,1], index: 4, kind: output, shape index: {}]
  %s5 = sld [smem:[#allocation0]]
  $region61: #{tpu_custom_call.1} parent=0
    _
  %s7 = ssub.s32 1, %s5
  %s8 = scalar_select 0, %s7, %s5
  %v9 = vstv %s3
  %10 = vst [vmem:[#allocation4] sm:$0x1] %v9
  $region1: #{tpu_custom_call.1} parent=0
    #allocation5 [shape = 'u8[65536]{0}', space=vmem, size = 0x10000, scoped, tag = 'input window, operand 0']
    #allocation6 [shape = 's32[2]{0}', space=sflag, size = 0x8, scoped, tag = 'scoped memory for tpu_custom_call.1']
    %11 = vsyncpa [#allocation6], 0
    %s12 = scalar_lea.sflag [#allocation6], 1
    %13 = vsyncpa %s12, 0
    loop: start=0, step=1, limit=4
    $region2: #{tpu_custom_call.1} parent=1 // loop_pre_header
      _
    $region3: #{tpu_custom_call.1} parent=1 // loop_header
      %s15 = sphi 0, %s19
      %p16 = scmp.ge.s32.totalorder %s15, 4
      %s22 = sphi 0, %s34
      %s23 = sphi 0, %s30
      %s24 = sphi 0, %s22
      %s25 = sphi 0, %s23
      %s26 = sphi 0, %s24
      %s27 = sphi 0, %s25
      %s39 = sphi 0, %s41
      %s42 = sphi 0, %s39
      %s43 = sphi 0, %s42
      %s59 = sphi 0, %s43
      %s67 = sphi 0, %s69
      %s70 = sphi 0, %s67
      %s71 = sphi 0, %s70
      %s87 = sphi 0, %s71
      %s91 = sphi 0, %s91
      %s93 = sphi 0, %s91
      %s94 = sphi 0, %s93
      %s108 = sphi 0, %s94
      %s112 = sphi 0, %s112
      %s114 = sphi 0, %s112
      %s115 = sphi 0, %s114
      %s129 = sphi 0, %s115
      %s135 = sphi 0, %s137
      %s138 = sphi 0, %s135
      %s139 = sphi 0, %s138
      %s155 = sphi 0, %s139
    $region4: #{tpu_custom_call.1} parent=1 // loop_header_branch
      %18 = sbr.rel (%p16) target = $region8
    $region5: #{tpu_custom_call.1} parent=1 // loop_body
      %s20 = ssub.s32 %s15, 1
      %s21 = ssub.s32 %s15, 2
      %s28 = sadd.s32 1, %s23
      %p29 = scmp.ge.s32.totalorder %s28, 1
      %s30 = scalar_select %p29, 0, %s28
      %s31 = sadd.s32 1, %s22
      %s32 = scalar_select %p29, %s31, %s22
      %p33 = scmp.ge.s32.totalorder %s32, 2
      %s34 = scalar_select %p33, 0, %s32
      %s35 = ssub.s32 %s22, %s34
      %s36 = ssub.s32 %s23, %s30
      %s37 = sor.u32 %s35, %s36
      %p38 = scmp.eq.s32.totalorder %s37, 0
      %s40 = sadd.s32 %s39, 1
      %s41 = scalar_select %p38, %s39, %s40
      %p44 = pneg %p38
      %p45 = scmp.eq.s32.totalorder %s15, 1
      %p46 = por %p44, %p45
      %p47 = scmp.ne.s32.totalorder %s39, %s42
      %p48 = scmp.eq.s32.totalorder %s15, 0
      %p49 = por %p47, %p48
      %p50 = scmp.ne.s32.totalorder %s39, %s42
      %p51 = scmp.eq.s32.totalorder %s20, 1
      %p52 = por %p50, %p51
      %p53 = scmp.ne.s32.totalorder %s42, %s43
      %p54 = scmp.eq.s32.totalorder %s20, 0
      %p55 = por %p53, %p54
      %p56 = scmp.ne.s32.totalorder %s42, %s43
      %p57 = scmp.eq.s32.totalorder %s21, 1
      %p58 = por %p56, %p57
      %p60 = scmp.ne.s32.totalorder %s43, %s59
      %p61 = scmp.eq.s32.totalorder %s21, 0
      %p62 = por %p60, %p61
      %s63 = ssub.s32 %s22, %s34
      %s64 = ssub.s32 %s23, %s30
      %s65 = sor.u32 %s63, %s64
      %p66 = scmp.eq.s32.totalorder %s65, 0
      %s68 = sadd.s32 %s67, 1
      %s69 = scalar_select %p66, %s67, %s68
      %p72 = pneg %p66
      %p73 = scmp.eq.s32.totalorder %s15, 1
      %p74 = por %p72, %p73
      %p75 = scmp.ne.s32.totalorder %s67, %s70
      %p76 = scmp.eq.s32.totalorder %s15, 0
      %p77 = por %p75, %p76
      %p78 = scmp.ne.s32.totalorder %s67, %s70
      %p79 = scmp.eq.s32.totalorder %s20, 1
      %p80 = por %p78, %p79
      %p81 = scmp.ne.s32.totalorder %s70, %s71
      %p82 = scmp.eq.s32.totalorder %s20, 0
      %p83 = por %p81, %p82
      %p84 = scmp.ne.s32.totalorder %s70, %s71
      %p85 = scmp.eq.s32.totalorder %s21, 1
      %p86 = por %p84, %p85
      %p88 = scmp.ne.s32.totalorder %s71, %s87
      %p89 = scmp.eq.s32.totalorder %s21, 0
      %p90 = por %p88, %p89
      %s92 = sadd.s32 %s91, 1
      %p95 = scmp.eq.s32.totalorder %s15, 1
      %p96 = scmp.ne.s32.totalorder %s91, %s93
      %p97 = scmp.eq.s32.totalorder %s15, 0
      %p98 = por %p96, %p97
      %p99 = scmp.ne.s32.totalorder %s91, %s93
      %p100 = scmp.eq.s32.totalorder %s20, 1
      %p101 = por %p99, %p100
      %p102 = scmp.ne.s32.totalorder %s93, %s94
      %p103 = scmp.eq.s32.totalorder %s20, 0
      %p104 = por %p102, %p103
      %p105 = scmp.ne.s32.totalorder %s93, %s94
      %p106 = scmp.eq.s32.totalorder %s21, 1
      %p107 = por %p105, %p106
      %p109 = scmp.ne.s32.totalorder %s94, %s108
      %p110 = scmp.eq.s32.totalorder %s21, 0
      %p111 = por %p109, %p110
      %s113 = sadd.s32 %s112, 1
      %p116 = scmp.eq.s32.totalorder %s15, 1
      %p117 = scmp.ne.s32.totalorder %s112, %s114
      %p118 = scmp.eq.s32.totalorder %s15, 0
      %p119 = por %p117, %p118
      %p120 = scmp.ne.s32.totalorder %s112, %s114
      %p121 = scmp.eq.s32.totalorder %s20, 1
      %p122 = por %p120, %p121
      %p123 = scmp.ne.s32.totalorder %s114, %s115
      %p124 = scmp.eq.s32.totalorder %s20, 0
      %p125 = por %p123, %p124
      %p126 = scmp.ne.s32.totalorder %s114, %s115
      %p127 = scmp.eq.s32.totalorder %s21, 1
      %p128 = por %p126, %p127
      %p130 = scmp.ne.s32.totalorder %s115, %s129
      %p131 = scmp.eq.s32.totalorder %s21, 0
      %p132 = por %p130, %p131
      %s133 = ssub.s32 %s22, %s34
      %p134 = scmp.eq.s32.totalorder %s133, 0
      %s136 = sadd.s32 %s135, 1
      %s137 = scalar_select %p134, %s135, %s136
      %p140 = pneg %p134
      %p141 = scmp.eq.s32.totalorder %s15, 1
      %p142 = por %p140, %p141
      %p143 = scmp.ne.s32.totalorder %s135, %s138
      %p144 = scmp.eq.s32.totalorder %s15, 0
      %p145 = por %p143, %p144
      %p146 = scmp.ne.s32.totalorder %s135, %s138
      %p147 = scmp.eq.s32.totalorder %s20, 1
      %p148 = por %p146, %p147
      %p149 = scmp.ne.s32.totalorder %s138, %s139
      %p150 = scmp.eq.s32.totalorder %s20, 0
      %p151 = por %p149, %p150
      %p152 = scmp.ne.s32.totalorder %s138, %s139
      %p153 = scmp.eq.s32.totalorder %s21, 1
      %p154 = por %p152, %p153
      %p156 = scmp.ne.s32.totalorder %s139, %s155
      %p157 = scmp.eq.s32.totalorder %s21, 0
      %p158 = por %p156, %p157
      %p159 = scmp.le.s32.totalorder 1, %s15
      %p160 = scmp.lt.s32.totalorder %s15, 3
      %p161 = pnand %p159, %p160
      %p162 = pneg %p161
      // Predicated region
      $region9: #{tpu_custom_call.1} parent=5 // pred_check
        _
      $region10: #{tpu_custom_call.1} parent=5 // pred_check_branch
        %164 = sbr.rel (%p161) target = $region12
      $region11: #{tpu_custom_call.1} parent=5 // pred_region
        %s165 = ssub.s32 %s15, 1
        // Predicated region
        $region13: #{tpu_custom_call.1} parent=11 // pred_check
          %p166 = pneg %p104
        $region14: #{tpu_custom_call.1} parent=11 // pred_check_branch
          %168 = sbr.rel (%p166) target = $region16
        $region15: #{tpu_custom_call.1} parent=11 // pred_region
          _
        $region16: #{tpu_custom_call.1} parent=11 // pred_fallthru
          _
        // Predicated region
        $region17: #{tpu_custom_call.1} parent=11 // pred_check
          %p169 = pneg %p125
        $region18: #{tpu_custom_call.1} parent=11 // pred_check_branch
          %171 = sbr.rel (%p169) target = $region20
        $region19: #{tpu_custom_call.1} parent=11 // pred_region
          _
        $region20: #{tpu_custom_call.1} parent=11 // pred_fallthru
          _
      $region12: #{tpu_custom_call.1} parent=5 // pred_fallthru
        _
      %p172 = scmp.lt.s32.totalorder %s15, 2
      // Predicated region
      $region21: #{tpu_custom_call.1} parent=5 // pred_check
        %p173 = pneg %p172
      $region22: #{tpu_custom_call.1} parent=5 // pred_check_branch
        %175 = sbr.rel (%p173) target = $region24
      $region23: #{tpu_custom_call.1} parent=5 // pred_region
        // Predicated region
        $region25: #{tpu_custom_call.1} parent=23 // pred_check
          %p176 = pneg %p49
        $region26: #{tpu_custom_call.1} parent=23 // pred_check_branch
          %178 = sbr.rel (%p176) target = $region28
        $region27: #{tpu_custom_call.1} parent=23 // pred_region
          %s179 = sand.u32 %s39, 1
          %s180 = scalar_lea.sflag [#allocation6], %s179
          %s181 = sand.u32 %s39, 1
          %s182 = smul.addr %s181, 64
          %s183 = scalar_lea.vmem [#allocation5], %s182
          %s184 = smul.u32 16, %s23
          %186 = vsyncadd %s180, 0
          %s187 = smul.addr %s22, 16
          %s188 = sadd.s32 %s184, %s187
          %s189 = smul.addr %s188, 4
          %s190 = scalar_lea.hbm %s0, %s189
          %s191 = sshll.u32 %s190, 4
          %s192 = int_to_ptr.hbm [resolvable:$true] %s191
          %s193 = sshll.u32 %s183, 4
          %s194 = int_to_ptr.vmem [resolvable:$true] %s193
          %199 = dma.hbm_to_vmem [thread:$0]  %s192, 1024, %s194, %s180, 64, 64, 4
        $region28: #{tpu_custom_call.1} parent=23 // pred_fallthru
          _
        // Predicated region
        $region29: #{tpu_custom_call.1} parent=23 // pred_check
          %p200 = pneg %p77
        $region30: #{tpu_custom_call.1} parent=23 // pred_check_branch
          %202 = sbr.rel (%p200) target = $region32
        $region31: #{tpu_custom_call.1} parent=23 // pred_region
          %p203 = scmp.lt.s32.totalorder %s22, 1
          %s204 = scalar_select %p203, %s22, 1
          %p205 = scmp.lt.s32.totalorder %s23, 0
          %s206 = scalar_select %p205, %s23, 0
          %s207 = sadd.s32 %s206, %s204
          %s208 = scalar_lea.vmem %s1, %s207
        $region32: #{tpu_custom_call.1} parent=23 // pred_fallthru
          _
      $region24: #{tpu_custom_call.1} parent=5 // pred_fallthru
        _
      %p209 = scmp.le.s32.totalorder 1, %s15
      %p210 = scmp.lt.s32.totalorder %s15, 3
      %p211 = pnand %p209, %p210
      %p212 = pneg %p211
      // Predicated region
      $region33: #{tpu_custom_call.1} parent=5 // pred_check
        _
      $region34: #{tpu_custom_call.1} parent=5 // pred_check_branch
        %214 = sbr.rel (%p211) target = $region36
      $region35: #{tpu_custom_call.1} parent=5 // pred_region
        %s215 = ssub.s32 %s15, 1
        %s216 = sand.u32 %s42, 1
        %s217 = scalar_lea.sflag [#allocation6], %s216
        %s218 = sand.u32 %s42, 1
        %s219 = smul.addr %s218, 64
        %s220 = scalar_lea.vmem [#allocation5], %s219
        // Predicated region
        $region37: #{tpu_custom_call.1} parent=35 // pred_check
          %p221 = pneg %p55
        $region38: #{tpu_custom_call.1} parent=35 // pred_check_branch
          %223 = sbr.rel (%p221) target = $region40
        $region39: #{tpu_custom_call.1} parent=35 // pred_region
          %225 = dma.done %s217, 1024
        $region40: #{tpu_custom_call.1} parent=35 // pred_fallthru
          _
        %s226 = sand.u32 %s42, 1
        %s227 = scalar_lea.sflag [#allocation6], %s226
        %s228 = sand.u32 %s42, 1
        %s229 = smul.addr %s228, 64
        %s230 = scalar_lea.vmem [#allocation5], %s229
        %p231 = pneg %p55
        %p232 = pneg %p52
        %p233 = scmp.lt.s32.totalorder %s24, 1
        %s234 = scalar_select %p233, %s24, 1
        %p235 = scmp.lt.s32.totalorder %s25, 0
        %s236 = scalar_select %p235, %s25, 0
        %s237 = sadd.s32 %s236, %s234
        %s238 = scalar_lea.vmem %s1, %s237
        %p239 = pneg %p83
        %p240 = pneg %p80
        %p241 = pneg %p104
        %p242 = pneg %p101
        %p243 = pneg %p125
        %p244 = pneg %p122
        %p245 = pneg %p151
        %p246 = pneg %p148
        %p247 = scmp.lt.s32.totalorder %s24, 1
        %s248 = scalar_select %p247, %s24, 1
        %s249 = scalar_lea.vmem %s4, %s248
        %s250 = smul.u32 16, %s25
        %p251 = scmp.lt.s32.totalorder %s24, 1
        %s252 = scalar_select %p251, %s24, 1
        %p253 = scmp.lt.s32.totalorder %s25, 0
        %s254 = scalar_select %p253, %s25, 0
        %s255 = sadd.s32 %s254, %s252
        %s256 = scalar_lea.vmem %s1, %s255
        %p257 = scmp.lt.s32.totalorder %s24, 1
        %s258 = scalar_select %p257, %s24, 1
        %s259 = scalar_lea.vmem %s4, %s258
        %p260 = scmp.eq.s32.totalorder %s25, 0
        // Predicated region
        $region41: #{tpu_custom_call.1} parent=35 // pred_check
          %p261 = pneg %p260
        $region42: #{tpu_custom_call.1} parent=35 // pred_check_branch
          %263 = sbr.rel (%p261) target = $region44
        $region43: #{tpu_custom_call.1} parent=35 // pred_region
          %264 = vst [vmem:[#allocation2] sm:$0x1] 0.0
          %vm265 = vcmask 0
          %266 = vst.msk [vmem:[#allocation3] sm:$0x1] %vm265, 0.0
        $region44: #{tpu_custom_call.1} parent=35 // pred_fallthru
          _
        %v267 = vld [vmem:[%s220] sm:$0xf]
        %v268 = vld [vmem:[%s220 + $0x4] sm:$0xf]
        %v269 = vld [vmem:[%s220 + $0x8] sm:$0xf]
        %v270 = vld [vmem:[%s220 + $0xc] sm:$0xf]
        %v271 = vld [vmem:[%s220 + $0x10] sm:$0xf]
        %v272 = vld [vmem:[%s220 + $0x14] sm:$0xf]
        %v273 = vld [vmem:[%s220 + $0x18] sm:$0xf]
        %v274 = vld [vmem:[%s220 + $0x1c] sm:$0xf]
        %v275 = vld [vmem:[%s220 + $0x20] sm:$0xf]
        %v276 = vld [vmem:[%s220 + $0x24] sm:$0xf]
        %v277 = vld [vmem:[%s220 + $0x28] sm:$0xf]
        %v278 = vld [vmem:[%s220 + $0x2c] sm:$0xf]
        %v279 = vld [vmem:[%s220 + $0x30] sm:$0xf]
        %v280 = vld [vmem:[%s220 + $0x34] sm:$0xf]
        %v281 = vld [vmem:[%s220 + $0x38] sm:$0xf]
        %v282 = vld [vmem:[%s220 + $0x3c] sm:$0xf]
        %v283 = vld [vmem:[%s256] sm:$0x1]
        %v284 = vld [vmem:[#allocation2] sm:$0x1]
        %v301 = vunpack.c.l.b16 %v267
        %v302 = vunpack.c.l.b16 %v268
        %v303 = vunpack.c.l.b16 %v269
        %v304 = vunpack.c.l.b16 %v270
        %v305 = vunpack.c.l.b16 %v271
        %v306 = vunpack.c.l.b16 %v272
        %v307 = vunpack.c.l.b16 %v273
        %v308 = vunpack.c.l.b16 %v274
        %v309 = vunpack.c.l.b16 %v275
        %v310 = vunpack.c.l.b16 %v276
        %v311 = vunpack.c.l.b16 %v277
        %v312 = vunpack.c.l.b16 %v278
        %v313 = vunpack.c.l.b16 %v279
        %v314 = vunpack.c.l.b16 %v280
        %v315 = vunpack.c.l.b16 %v281
        %v316 = vunpack.c.l.b16 %v282
        %v317 = vpack.c.b16 %v302, %v301
        %v318 = vpack.c.b16 %v304, %v303
        %v319 = vpack.c.b16 %v306, %v305
        %v320 = vpack.c.b16 %v308, %v307
        %v321 = vpack.c.b16 %v310, %v309
        %v322 = vpack.c.b16 %v312, %v311
        %v323 = vpack.c.b16 %v314, %v313
        %v324 = vpack.c.b16 %v316, %v315
        %333 = vmatpush.bf16.msra.mxu0 %v324
        %334 = vmatpush.bf16.msra.mxu0 %v323
        %335 = vmatpush.bf16.msra.mxu0 %v322
        %336 = vmatpush.bf16.msra.mxu0 %v321
        %337 = vmatpush.bf16.msra.mxu0 %v320
        %338 = vmatpush.bf16.msra.mxu0 %v319
        %339 = vmatpush.bf16.msra.mxu0 %v318
        %340 = vmatpush.bf16.msra.mxu0 %v317
        %341 = vmatmul.bf16.gmra.mxu0 %v283
        %v342 = vpop.f32.mrf.mxu0
        %v343 = vadd.f32 0.0, %v342
        %v344 = vpop.f32.mrf.mxu0
        %345 = vdwg.mxu0
        %v346 = vadd.f32 %v284, %v343
        %347 = vst [vmem:[#allocation2] sm:$0x1] %v346
        %v348 = vld [vmem:[#allocation3] sm:$0x1]
        %v349 = vunpack.c.l.bf16 %v283
        %vm350 = vcmask 1040384
        %v351 = vsel %vm350, %v349, 0.0
        %352 = vadd.xlane.f32.xlu0 %v351
        %v353 = vpop.xlane.xlu0 %352
        %v354 = vadd.f32 %v348, %v353
        %vm355 = vcmask 0
        %356 = vst.msk [vmem:[#allocation3] sm:$0x1] %vm355, %v354
        // Predicated region
        $region45: #{tpu_custom_call.1} parent=35 // pred_check
          %p357 = pneg %p260
        $region46: #{tpu_custom_call.1} parent=35 // pred_check_branch
          %359 = sbr.rel (%p357) target = $region48
        $region47: #{tpu_custom_call.1} parent=35 // pred_region
          %v360 = vld [vmem:[#allocation3] sm:$0x1]
          %vm361 = vcmp.eq.f32.partialorder %v360, 0.0
          %v362 = vsel %vm361, 1.0, %v360
          %v363 = vld [vmem:[#allocation2] sm:$0x1]
          %365 = vset.pattern.permute.xlu0 0
          %366 = vperm.xlu0 %365, %v362
          %v367 = vpop.permute.xlu0 %366
          %v369 = vperm.slane %v367, 0
          %v370 = vrcp.pop %v369
          %v371 = vmul.f32 %v369, %v370
          %v372 = vsub.f32 1.0, %v371
          %v373 = vmul.f32 %v370, %v372
          %v374 = vadd.f32 %v370, %v373
          %vm375 = vweird.f32 %v369
          %vm376 = vweird.f32 %v370
          %vm377 = vmor %vm375, %vm376
          %v378 = vsel %vm377, %v370, %v374
          %v379 = vand.u32 2147483647, %v369
          %vm380 = vcmp.eq.f32.partialorder %v379, 8.507059e+37
          %v381 = vand.u32 %v369, 2147483648
          %v382 = vor.u32 1.1754944e-38, %v381
          %v383 = vsel %vm380, %v382, %v378
          %v384 = vmul.f32 %v363, %v383
          %v385 = vld [vmem:[%s2] sm:$0x1]
          %v386 = vmul.f32 %v384, %v385
          %v387 = vsel %vm350, %v386, 0.0
          %388 = vadd.xlane.f32.xlu0 %v387
          %v389 = vpop.xlane.xlu0 %388
          %v390 = vld [vmem:[#allocation4] sm:$0x1]
          %v391 = vadd.f32 %v389, %v390
          %392 = vst.msk [vmem:[%s259] sm:$0x1] %vm355, %v391
        $region48: #{tpu_custom_call.1} parent=35 // pred_fallthru
          _
        %p393 = scmp.lt.s32.totalorder %s24, 1
        %s394 = scalar_select %p393, %s24, 1
        %s395 = scalar_lea.vmem %s4, %s394
        // Predicated region
        $region49: #{tpu_custom_call.1} parent=35 // pred_check
          %p396 = pneg %p148
        $region50: #{tpu_custom_call.1} parent=35 // pred_check_branch
          %398 = sbr.rel (%p396) target = $region52
        $region51: #{tpu_custom_call.1} parent=35 // pred_region
          _
        $region52: #{tpu_custom_call.1} parent=35 // pred_fallthru
          _
      $region36: #{tpu_custom_call.1} parent=5 // pred_fallthru
        _
      %p399 = scmp.le.s32.totalorder 2, %s15
      // Predicated region
      $region53: #{tpu_custom_call.1} parent=5 // pred_check
        %p400 = pneg %p399
      $region54: #{tpu_custom_call.1} parent=5 // pred_check_branch
        %402 = sbr.rel (%p400) target = $region56
      $region55: #{tpu_custom_call.1} parent=5 // pred_region
        %s403 = ssub.s32 %s15, 2
        // Predicated region
        $region57: #{tpu_custom_call.1} parent=55 // pred_check
          %p404 = pneg %p154
        $region58: #{tpu_custom_call.1} parent=55 // pred_check_branch
          %406 = sbr.rel (%p404) target = $region60
        $region59: #{tpu_custom_call.1} parent=55 // pred_region
          %p407 = scmp.lt.s32.totalorder %s26, 1
          %s408 = scalar_select %p407, %s26, 1
          %s409 = scalar_lea.vmem %s4, %s408
        $region60: #{tpu_custom_call.1} parent=55 // pred_fallthru
          _
      $region56: #{tpu_custom_call.1} parent=5 // pred_fallthru
        _
    $region6: #{tpu_custom_call.1} parent=1 // loop_footer
      %s19 = sadd.s32 1, %s15
    $region7: #{tpu_custom_call.1} parent=1 // loop_footer_branch
      %14 = sbr.rel target = $region3
    $region8: #{tpu_custom_call.1} parent=1 // loop_exit
      _
    %410 = vsyncpa [#allocation6], 1
    %s411 = scalar_lea.sflag [#allocation6], 1
    %412 = vsyncpa %s411, 1

</llo_original>
